<compile_context>
chip_gen: v5e
topology: v5e:2x2
jax: 0.10.0
libtpu: 0.0.40
codegen_flags: <defaults>
</compile_context>

<pallas_src>
import functools

import jax
import jax.numpy as jnp
from jax.experimental import pallas as pl
from jax.experimental.pallas import tpu as pltpu


# ---------------------------------------------------------------------------
# Stage 1: fused LayerNorm + QKV projection (single matmul over [wq|wk|wv])
# ---------------------------------------------------------------------------
def _ln_qkv_kernel(x_ref, gamma_ref, beta_ref, wqkv_ref, q_ref, k_ref, v_ref,
                   *, eps, key_depth):
    x = x_ref[...].astype(jnp.float32)                       # (tm, D)
    d = x.shape[-1]
    mean = jnp.mean(x, axis=-1, keepdims=True)
    cent = x - mean
    var = jnp.sum(cent * cent, axis=-1, keepdims=True) * (1.0 / (d - 1))
    std = jnp.sqrt(var)                                      # unbiased (torch .std)
    xn = gamma_ref[...] * cent / (std + eps) + beta_ref[...]
    qkv = jnp.dot(xn, wqkv_ref[...], preferred_element_type=jnp.float32)
    q_ref[...] = qkv[:, :key_depth].astype(q_ref.dtype)
    k_ref[...] = qkv[:, key_depth:2 * key_depth].astype(k_ref.dtype)
    v_ref[...] = qkv[:, 2 * key_depth:].astype(v_ref.dtype)


def ln_qkv_proj(x2d, gamma, beta, wqkv, key_depth, *, eps):
    rows, d = x2d.shape
    n_out = wqkv.shape[-1]
    value_depth = n_out - 2 * key_depth
    tm = rows if rows <= 256 else 256
    grid = (pl.cdiv(rows, tm),)
    gamma2d = gamma.reshape(1, d).astype(jnp.float32)
    beta2d = beta.reshape(1, d).astype(jnp.float32)
    return pl.pallas_call(
        functools.partial(_ln_qkv_kernel, eps=eps, key_depth=key_depth),
        out_shape=(jax.ShapeDtypeStruct((rows, key_depth), x2d.dtype),
                   jax.ShapeDtypeStruct((rows, key_depth), x2d.dtype),
                   jax.ShapeDtypeStruct((rows, value_depth), x2d.dtype)),
        grid_spec=pltpu.PrefetchScalarGridSpec(
            num_scalar_prefetch=0,
            grid=grid,
            in_specs=[
                pl.BlockSpec((tm, d), lambda i: (i, 0)),
                pl.BlockSpec((1, d), lambda i: (0, 0)),
                pl.BlockSpec((1, d), lambda i: (0, 0)),
                pl.BlockSpec((d, n_out), lambda i: (0, 0)),
            ],
            out_specs=[
                pl.BlockSpec((tm, key_depth), lambda i: (i, 0)),
                pl.BlockSpec((tm, key_depth), lambda i: (i, 0)),
                pl.BlockSpec((tm, value_depth), lambda i: (i, 0)),
            ],
        ),
        compiler_params=pltpu.CompilerParams(
            dimension_semantics=("parallel",)),
        cost_estimate=pl.CostEstimate(
            flops=2 * rows * d * n_out + 10 * rows * d,
            transcendentals=rows,
            bytes_accessed=(rows * d + d * n_out + rows * n_out) * 4),
    )(x2d, gamma2d, beta2d, wqkv)


# ---------------------------------------------------------------------------
# Stage 2: flash-style multi-head attention (no host-side head transposes,
#          online softmax, KV grid axis 'arbitrary', O(tile) VMEM)
# ---------------------------------------------------------------------------
def _mha_kernel(q_ref, k_ref, v_ref, o_ref, m_sc, l_sc, acc_sc,
                *, num_heads, dk, dv, scale):
    kv_i = pl.program_id(2)

    @pl.when(kv_i == 0)
    def _init():
        m_sc[...] = jnp.full_like(m_sc, -jnp.inf)
        l_sc[...] = jnp.zeros_like(l_sc)
        acc_sc[...] = jnp.zeros_like(acc_sc)

    q = q_ref[0].astype(jnp.float32) * scale                 # (tq, H*dk)
    k = k_ref[0].astype(jnp.float32)                         # (tk, H*dk)
    v = v_ref[0].astype(jnp.float32)                         # (tk, H*dv)

    for h in range(num_heads):                               # static unrolled
        qh = q[:, h * dk:(h + 1) * dk]
        kh = k[:, h * dk:(h + 1) * dk]
        vh = v[:, h * dv:(h + 1) * dv]
        s = jax.lax.dot_general(qh, kh, (((1,), (1,)), ((), ())),
                                preferred_element_type=jnp.float32)  # (tq, tk)
        m_prev = m_sc[h]                                     # (tq, 1)
        m_new = jnp.maximum(m_prev, jnp.max(s, axis=-1, keepdims=True))
        alpha = jnp.exp(m_prev - m_new)
        p = jnp.exp(s - m_new)
        l_sc[h] = alpha * l_sc[h] + jnp.sum(p, axis=-1, keepdims=True)
        acc_sc[h] = alpha * acc_sc[h] + jnp.dot(
            p, vh, preferred_element_type=jnp.float32)
        m_sc[h] = m_new

    @pl.when(kv_i == pl.num_programs(2) - 1)
    def _finalize():
        ctx = jnp.concatenate(
            [acc_sc[h] / l_sc[h] for h in range(num_heads)], axis=-1)
        o_ref[0] = ctx.astype(o_ref.dtype)                   # lane-dense (tq, H*dv)


def attention(q, k, v, *, num_heads, scale):
    """q, k: (B, S, H*dk); v: (B, S, H*dv) -> (B, S, H*dv)."""
    B, S, hdk = q.shape
    hdv = v.shape[-1]
    dk = hdk // num_heads
    dv = hdv // num_heads
    tq = S if S <= 128 else 128
    tk = S if S <= 128 else 128
    assert S % tq == 0 and S % tk == 0, "sequence length must tile evenly"
    grid = (B, S // tq, S // tk)
    return pl.pallas_call(
        functools.partial(_mha_kernel, num_heads=num_heads, dk=dk, dv=dv,
                          scale=scale),
        out_shape=jax.ShapeDtypeStruct((B, S, hdv), q.dtype),
        grid_spec=pltpu.PrefetchScalarGridSpec(
            num_scalar_prefetch=0,
            grid=grid,
            in_specs=[
                pl.BlockSpec((1, tq, hdk), lambda b, qi, ki: (b, qi, 0)),
                pl.BlockSpec((1, tk, hdk), lambda b, qi, ki: (b, ki, 0)),
                pl.BlockSpec((1, tk, hdv), lambda b, qi, ki: (b, ki, 0)),
            ],
            out_specs=pl.BlockSpec((1, tq, hdv), lambda b, qi, ki: (b, qi, 0)),
            scratch_shapes=[
                pltpu.VMEM((num_heads, tq, 1), jnp.float32),   # running max
                pltpu.VMEM((num_heads, tq, 1), jnp.float32),   # running denom
                pltpu.VMEM((num_heads, tq, dv), jnp.float32),  # running context
            ],
        ),
        compiler_params=pltpu.CompilerParams(
            dimension_semantics=("parallel", "parallel", "arbitrary")),
        cost_estimate=pl.CostEstimate(
            flops=2 * B * num_heads * S * S * (dk + dv),
            transcendentals=B * num_heads * S * S,
            bytes_accessed=2 * (B * S * hdk + B * S * hdv) * 4),
    )(q, k, v)


# ---------------------------------------------------------------------------
# Stage 3: output projection with fused residual add
# ---------------------------------------------------------------------------
def _out_proj_residual_kernel(ctx_ref, wo_ref, res_ref, o_ref):
    y = jnp.dot(ctx_ref[...], wo_ref[...], preferred_element_type=jnp.float32)
    o_ref[...] = (res_ref[...].astype(jnp.float32) + y).astype(o_ref.dtype)


def out_proj_residual(ctx2d, wo, res2d):
    rows, hdv = ctx2d.shape
    d = wo.shape[-1]
    tm = rows if rows <= 256 else 256
    grid = (pl.cdiv(rows, tm),)
    return pl.pallas_call(
        _out_proj_residual_kernel,
        out_shape=jax.ShapeDtypeStruct((rows, d), res2d.dtype),
        grid_spec=pltpu.PrefetchScalarGridSpec(
            num_scalar_prefetch=0,
            grid=grid,
            in_specs=[
                pl.BlockSpec((tm, hdv), lambda i: (i, 0)),
                pl.BlockSpec((hdv, d), lambda i: (0, 0)),
                pl.BlockSpec((tm, d), lambda i: (i, 0)),
            ],
            out_specs=pl.BlockSpec((tm, d), lambda i: (i, 0)),
        ),
        compiler_params=pltpu.CompilerParams(
            dimension_semantics=("parallel",)),
        cost_estimate=pl.CostEstimate(
            flops=2 * rows * hdv * d + rows * d,
            transcendentals=0,
            bytes_accessed=(rows * hdv + hdv * d + 2 * rows * d) * 4),
    )(ctx2d, wo, res2d)


# ---------------------------------------------------------------------------
# Stage 4: fused LayerNorm + conv3/ReLU + conv3/ReLU + residual
#          (each conv = one MXU matmul via in-kernel im2col; the filter-size
#           intermediate and the padding halo never touch HBM)
# ---------------------------------------------------------------------------
def _ln_ffn_residual_kernel(x_ref, gamma_ref, beta_ref, w1_ref, b1_ref,
                            w2_ref, b2_ref, o_ref, *, eps):
    x = x_ref[0].astype(jnp.float32)                         # (S, D)
    d = x.shape[-1]
    mean = jnp.mean(x, axis=-1, keepdims=True)
    cent = x - mean
    var = jnp.sum(cent * cent, axis=-1, keepdims=True) * (1.0 / (d - 1))
    xn = gamma_ref[...] * cent / (jnp.sqrt(var) + eps) + beta_ref[...]

    def shifted_cat(t):
        # im2col for kernel_size=3, pad_type='both': row t -> [t-1 | t | t+1]
        zrow = jnp.zeros((1, t.shape[-1]), jnp.float32)
        tm1 = jnp.concatenate([zrow, t[:-1, :]], axis=0)
        tp1 = jnp.concatenate([t[1:, :], zrow], axis=0)
        return jnp.concatenate([tm1, t, tp1], axis=-1)       # (S, 3*C)

    h = jnp.dot(shifted_cat(xn), w1_ref[...],
                preferred_element_type=jnp.float32) + b1_ref[...]
    h = jnp.maximum(h, 0.0)                                  # ReLU (dropout == identity)
    y = jnp.dot(shifted_cat(h), w2_ref[...],
                preferred_element_type=jnp.float32) + b2_ref[...]
    y = jnp.maximum(y, 0.0)                                  # reference ReLUs after BOTH convs
    o_ref[0] = (x + y).astype(o_ref.dtype)                   # fused residual


def ln_ffn_residual(x, gamma, beta, w1, b1, w2, b2, *, eps):
    B, S, D = x.shape
    F = w1.shape[-1]
    w1f = w1.reshape(3 * D, F)                               # [w1[0]; w1[1]; w1[2]]
    w2f = w2.reshape(3 * F, D)
    gamma2d = gamma.reshape(1, D).astype(jnp.float32)
    beta2d = beta.reshape(1, D).astype(jnp.float32)
    b1_2d = b1.reshape(1, F).astype(jnp.float32)
    b2_2d = b2.reshape(1, D).astype(jnp.float32)
    return pl.pallas_call(
        functools.partial(_ln_ffn_residual_kernel, eps=eps),
        out_shape=jax.ShapeDtypeStruct((B, S, D), x.dtype),
        grid_spec=pltpu.PrefetchScalarGridSpec(
            num_scalar_prefetch=0,
            grid=(B,),
            in_specs=[
                pl.BlockSpec((1, S, D), lambda b: (b, 0, 0)),
                pl.BlockSpec((1, D), lambda b: (0, 0)),
                pl.BlockSpec((1, D), lambda b: (0, 0)),
                pl.BlockSpec((3 * D, F), lambda b: (0, 0)),
                pl.BlockSpec((1, F), lambda b: (0, 0)),
                pl.BlockSpec((3 * F, D), lambda b: (0, 0)),
                pl.BlockSpec((1, D), lambda b: (0, 0)),
            ],
            out_specs=pl.BlockSpec((1, S, D), lambda b: (b, 0, 0)),
        ),
        compiler_params=pltpu.CompilerParams(
            dimension_semantics=("parallel",)),
        cost_estimate=pl.CostEstimate(
            flops=2 * B * S * 3 * D * F * 2 + 14 * B * S * D,
            transcendentals=B * S,
            bytes_accessed=(2 * B * S * D + 3 * D * F + 3 * F * D) * 4),
    )(x, gamma2d, beta2d, w1f, b1_2d, w2f, b2_2d)


# ---------------------------------------------------------------------------
# EncoderLayer forward (inference: all dropouts are identity)
# ---------------------------------------------------------------------------
def encoder_layer_forward(x, params, *, num_heads, eps=1e-6):
    B, S, D = x.shape
    key_depth = params["wq"].shape[-1]
    value_depth = params["wv"].shape[-1]
    dk = key_depth // num_heads

    # --- pre-norm + multi-head self-attention + residual ---
    # (weights pre-concatenated; could be done once at param setup)
    wqkv = jnp.concatenate([params["wq"], params["wk"], params["wv"]], axis=-1)
    x2d = x.reshape(B * S, D)
    q2d, k2d, v2d = ln_qkv_proj(x2d, params["ln_mha_gamma"],
                                params["ln_mha_beta"], wqkv, key_depth, eps=eps)
    q = q2d.reshape(B, S, key_depth)      # contiguous reshapes only — no transposes
    k = k2d.reshape(B, S, key_depth)
    v = v2d.reshape(B, S, value_depth)
    ctx = attention(q, k, v, num_heads=num_heads, scale=dk ** -0.5)  # (B,S,H*dv)
    x = out_proj_residual(ctx.reshape(B * S, value_depth), params["wo"],
                          x2d).reshape(B, S, D)

    # --- pre-norm + positionwise FFN ('cc': conv3->ReLU->conv3->ReLU) + residual ---
    return ln_ffn_residual(x, params["ln_ffn_gamma"], params["ln_ffn_beta"],
                           params["conv1_w"], params["conv1_b"],
                           params["conv2_w"], params["conv2_b"], eps=eps)


# ---------------------------------------------------------------------------
# Pure-JAX reference (mirrors the PyTorch module at inference)
# ---------------------------------------------------------------------------
def reference_forward(x, params, *, num_heads, eps=1e-6):
    def ln(z, g, b):
        n = z.shape[-1]
        mean = jnp.mean(z, axis=-1, keepdims=True)
        std = jnp.sqrt(jnp.sum((z - mean) ** 2, axis=-1, keepdims=True) / (n - 1))
        return g * (z - mean) / (std + eps) + b

    B, S, D = x.shape
    x_norm = ln(x, params["ln_mha_gamma"], params["ln_mha_beta"])
    q = x_norm @ params["wq"]
    k = x_norm @ params["wk"]
    v = x_norm @ params["wv"]
    dk = params["wq"].shape[-1] // num_heads
    dv = params["wv"].shape[-1] // num_heads

    def split(t, d):
        return t.reshape(B, S, num_heads, d).transpose(0, 2, 1, 3)

    qh, kh, vh = split(q, dk), split(k, dk), split(v, dv)
    logits = jnp.einsum("bhqd,bhkd->bhqk", qh * dk ** -0.5, kh)
    w = jax.nn.softmax(logits, axis=-1)
    ctx = jnp.einsum("bhqk,bhkd->bhqd", w, vh)
    ctx = ctx.transpose(0, 2, 1, 3).reshape(B, S, num_heads * dv)
    x = x + ctx @ params["wo"]

    x_norm = ln(x, params["ln_ffn_gamma"], params["ln_ffn_beta"])

    def conv(z, w3, b):
        zp = jnp.pad(z, ((0, 0), (1, 1), (0, 0)))
        out = zp[:, 0:S] @ w3[0] + zp[:, 1:S + 1] @ w3[1] + zp[:, 2:S + 2] @ w3[2] + b
        return jax.nn.relu(out)

    h = conv(x_norm, params["conv1_w"], params["conv1_b"])
    h = conv(h, params["conv2_w"], params["conv2_b"])
    return x + h


if __name__ == "__main__":
    batch, seq, hidden = 2, 8, 32
    key_depth, value_depth, filter_size, num_heads = 32, 32, 64, 4
    eps = 1e-6

    keys = jax.random.split(jax.random.PRNGKey(0), 9)
    wscale = 0.05
    params = {
        "ln_mha_gamma": jnp.ones((hidden,), jnp.float32),
        "ln_mha_beta": jnp.zeros((hidden,), jnp.float32),
        "ln_ffn_gamma": jnp.ones((hidden,), jnp.float32),
        "ln_ffn_beta": jnp.zeros((hidden,), jnp.float32),
        # Linear weights stored pre-transposed: (in, out) == torch weight.T
        "wq": wscale * jax.random.normal(keys[0], (hidden, key_depth), jnp.float32),
        "wk": wscale * jax.random.normal(keys[1], (hidden, key_depth), jnp.float32),
        "wv": wscale * jax.random.normal(keys[2], (hidden, value_depth), jnp.float32),
        "wo": wscale * jax.random.normal(keys[3], (value_depth, hidden), jnp.float32),
        # Conv1d weights stored as (K, Cin, Cout) == torch weight.permute(2, 1, 0)
        "conv1_w": wscale * jax.random.normal(keys[4], (3, hidden, filter_size), jnp.float32),
        "conv1_b": wscale * jax.random.normal(keys[5], (filter_size,), jnp.float32),
        "conv2_w": wscale * jax.random.normal(keys[6], (3, filter_size, hidden), jnp.float32),
        "conv2_b": wscale * jax.random.normal(keys[7], (hidden,), jnp.float32),
    }
    x = jax.random.normal(keys[8], (batch, seq, hidden), jnp.float32)

    y = encoder_layer_forward(x, params, num_heads=num_heads, eps=eps)
    y = jax.block_until_ready(y)

    ref = reference_forward(x, params, num_heads=num_heads, eps=eps)

    assert y.shape == x.shape and y.dtype == x.dtype
    max_err = float(jnp.max(jnp.abs(y - ref)))
    assert max_err < 1e-3, f"mismatch vs reference: max abs err {max_err}"

    print("KERNEL_OK")
</pallas_src>

<mosaic_0001>
module attributes {stable_mosaic.version = 11 : i64} {
  func.func @_ln_qkv_kernel(%arg0: i32, %arg1: memref<16x32xf32, #tpu.memory_space<vmem>>, %arg2: memref<1x32xf32, #tpu.memory_space<vmem>>, %arg3: memref<1x32xf32, #tpu.memory_space<vmem>>, %arg4: memref<32x96xf32, #tpu.memory_space<vmem>>, %arg5: memref<16x32xf32, #tpu.memory_space<vmem>>, %arg6: memref<16x32xf32, #tpu.memory_space<vmem>>, %arg7: memref<16x32xf32, #tpu.memory_space<vmem>>) attributes {dimension_semantics = [#tpu.dimension_semantics<parallel>], iteration_bounds = array<i64: 1>, scalar_prefetch = 0 : i64, scratch_operands = 0 : i64, tpu.core_type = #tpu.core_type<tc>, window_params = [{transform_indices = @transform_0, window_bounds = array<i64: 16, 32>}, {pipeline_mode = #tpu.pipeline_mode<synchronous>, transform_indices = @transform_1, window_bounds = array<i64: 1, 32>}, {pipeline_mode = #tpu.pipeline_mode<synchronous>, transform_indices = @transform_2, window_bounds = array<i64: 1, 32>}, {pipeline_mode = #tpu.pipeline_mode<synchronous>, transform_indices = @transform_3, window_bounds = array<i64: 32, 96>}, {transform_indices = @transform_4, window_bounds = array<i64: 16, 32>}, {transform_indices = @transform_5, window_bounds = array<i64: 16, 32>}, {transform_indices = @transform_6, window_bounds = array<i64: 16, 32>}]} {
    %c0 = arith.constant 0 : index
    %c0_0 = arith.constant 0 : index
    %0 = vector.load %arg1[%c0, %c0_0] : memref<16x32xf32, #tpu.memory_space<vmem>>, vector<16x32xf32>
    %cst = arith.constant dense<0.000000e+00> : vector<16xf32>
    %1 = vector.multi_reduction <add>, %0, %cst [1] : vector<16x32xf32> to vector<16xf32>
    %2 = vector.shape_cast %1 : vector<16xf32> to vector<16x1xf32>
    %cst_1 = arith.constant 3.200000e+01 : f32
    %3 = vector.broadcast %cst_1 : f32 to vector<16x1xf32>
    %4 = arith.divf %2, %3 : vector<16x1xf32>
    %5 = vector.broadcast %4 : vector<16x1xf32> to vector<16x32xf32>
    %6 = arith.subf %0, %5 : vector<16x32xf32>
    %7 = arith.mulf %6, %6 : vector<16x32xf32>
    %cst_2 = arith.constant dense<0.000000e+00> : vector<16xf32>
    %8 = vector.multi_reduction <add>, %7, %cst_2 [1] : vector<16x32xf32> to vector<16xf32>
    %9 = vector.shape_cast %8 : vector<16xf32> to vector<16x1xf32>
    %cst_3 = arith.constant 0.0322580636 : f32
    %10 = vector.broadcast %cst_3 : f32 to vector<16x1xf32>
    %11 = arith.mulf %9, %10 : vector<16x1xf32>
    %12 = math.sqrt %11 : vector<16x1xf32>
    %c0_4 = arith.constant 0 : index
    %c0_5 = arith.constant 0 : index
    %13 = vector.load %arg2[%c0_4, %c0_5] : memref<1x32xf32, #tpu.memory_space<vmem>>, vector<1x32xf32>
    %14 = vector.broadcast %13 : vector<1x32xf32> to vector<16x32xf32>
    %15 = arith.mulf %14, %6 : vector<16x32xf32>
    %cst_6 = arith.constant 9.99999997E-7 : f32
    %16 = vector.broadcast %cst_6 : f32 to vector<16x1xf32>
    %17 = arith.addf %12, %16 : vector<16x1xf32>
    %18 = vector.broadcast %17 : vector<16x1xf32> to vector<16x32xf32>
    %19 = arith.divf %15, %18 : vector<16x32xf32>
    %c0_7 = arith.constant 0 : index
    %c0_8 = arith.constant 0 : index
    %20 = vector.load %arg3[%c0_7, %c0_8] : memref<1x32xf32, #tpu.memory_space<vmem>>, vector<1x32xf32>
    %21 = vector.broadcast %20 : vector<1x32xf32> to vector<16x32xf32>
    %22 = arith.addf %19, %21 : vector<16x32xf32>
    %c0_9 = arith.constant 0 : index
    %c0_10 = arith.constant 0 : index
    %23 = vector.load %arg4[%c0_9, %c0_10] : memref<32x96xf32, #tpu.memory_space<vmem>>, vector<32x96xf32>
    %cst_11 = arith.constant dense<0.000000e+00> : vector<16x96xf32>
    %24 = tpu.matmul %22, %23, %cst_11 {dimension_numbers = #tpu.dot_dimension_numbers<[1], [0], [0], [1], [0, 0, 1, 1], [], []>} : vector<16x32xf32>, vector<32x96xf32>, vector<16x96xf32> -> vector<16x96xf32>
    %25 = vector.extract_strided_slice %24 {offsets = [0, 0], sizes = [16, 32], strides = [1, 1]} : vector<16x96xf32> to vector<16x32xf32>
    %c0_12 = arith.constant 0 : index
    %c0_13 = arith.constant 0 : index
    %26 = vector.load %arg5[%c0_12, %c0_13] : memref<16x32xf32, #tpu.memory_space<vmem>>, vector<16x32xf32>
    tpu.vector_store %arg5[%c0_12, %c0_13], %25 {strides = array<i32>} : memref<16x32xf32, #tpu.memory_space<vmem>>, vector<16x32xf32>,
    %27 = vector.extract_strided_slice %24 {offsets = [0, 32], sizes = [16, 32], strides = [1, 1]} : vector<16x96xf32> to vector<16x32xf32>
    %c0_14 = arith.constant 0 : index
    %c0_15 = arith.constant 0 : index
    %28 = vector.load %arg6[%c0_14, %c0_15] : memref<16x32xf32, #tpu.memory_space<vmem>>, vector<16x32xf32>
    tpu.vector_store %arg6[%c0_14, %c0_15], %27 {strides = array<i32>} : memref<16x32xf32, #tpu.memory_space<vmem>>, vector<16x32xf32>,
    %29 = vector.extract_strided_slice %24 {offsets = [0, 64], sizes = [16, 32], strides = [1, 1]} : vector<16x96xf32> to vector<16x32xf32>
    %c0_16 = arith.constant 0 : index
    %c0_17 = arith.constant 0 : index
    %30 = vector.load %arg7[%c0_16, %c0_17] : memref<16x32xf32, #tpu.memory_space<vmem>>, vector<16x32xf32>
    tpu.vector_store %arg7[%c0_16, %c0_17], %29 {strides = array<i32>} : memref<16x32xf32, #tpu.memory_space<vmem>>, vector<16x32xf32>,
    return
  }
  func.func @transform_0(%arg0: i32) -> (i32, i32) {
    %c0_i32 = arith.constant 0 : i32
    %c0_i32_0 = arith.constant 0 : i32
    return %arg0, %c0_i32 : i32, i32
  }
  func.func @transform_1(%arg0: i32) -> (i32, i32) {
    %c0_i32 = arith.constant 0 : i32
    %c0_i32_0 = arith.constant 0 : i32
    %c0_i32_1 = arith.constant 0 : i32
    return %c0_i32, %c0_i32_0 : i32, i32
  }
  func.func @transform_2(%arg0: i32) -> (i32, i32) {
    %c0_i32 = arith.constant 0 : i32
    %c0_i32_0 = arith.constant 0 : i32
    %c0_i32_1 = arith.constant 0 : i32
    return %c0_i32, %c0_i32_0 : i32, i32
  }
  func.func @transform_3(%arg0: i32) -> (i32, i32) {
    %c0_i32 = arith.constant 0 : i32
    %c0_i32_0 = arith.constant 0 : i32
    %c0_i32_1 = arith.constant 0 : i32
    return %c0_i32, %c0_i32_0 : i32, i32
  }
  func.func @transform_4(%arg0: i32) -> (i32, i32) {
    %c0_i32 = arith.constant 0 : i32
    %c0_i32_0 = arith.constant 0 : i32
    return %arg0, %c0_i32 : i32, i32
  }
  func.func @transform_5(%arg0: i32) -> (i32, i32) {
    %c0_i32 = arith.constant 0 : i32
    %c0_i32_0 = arith.constant 0 : i32
    return %arg0, %c0_i32 : i32, i32
  }
  func.func @transform_6(%arg0: i32) -> (i32, i32) {
    %c0_i32 = arith.constant 0 : i32
    %c0_i32_0 = arith.constant 0 : i32
    return %arg0, %c0_i32 : i32, i32
  }
}

</mosaic_0001>

<llo_original>
// kernel: tpu_custom_call.1
$region0: #{tpu_custom_call.1}
  #allocation0 [shape = 'u32[]', space=smem, size = 0x4, offset = 0x4, fixed_abs, tag = 'smem constant byte address 0x4 - core index']
  #allocation1 [shape = 'u32[72,128]{1,0:T(1,128)}', space=vmem, size = 0x9000, scoped, tag = 'internal scratch']
  %s0 = inlined_call_operand.hbm [shape: f32[16,32], index: 0, kind: input, shape index: {}]
  %s1 = inlined_call_operand.hbm [shape: f32[1,32], index: 1, kind: input, shape index: {}]
  %s2 = inlined_call_operand.vmem [shape: f32[1,32], index: 2, kind: input, shape index: {}]
  %s3 = inlined_call_operand.hbm [shape: f32[32,96], index: 3, kind: input, shape index: {}]
  %s4 = inlined_call_operand.hbm [shape: f32[16,32], index: 4, kind: output, shape index: {0}]
  %s5 = inlined_call_operand.hbm [shape: f32[16,32], index: 5, kind: output, shape index: {1}]
  %s6 = inlined_call_operand.hbm [shape: f32[16,32], index: 6, kind: output, shape index: {2}]
  %7 = xla_tuple %s4, %s5, %s6
  %s8 = sld [smem:[#allocation0]]
  $region54: #{tpu_custom_call.1} parent=0
    _
  %s10 = ssub.s32 1, %s8
  %s11 = scalar_select 0, %s10, %s8
  $region1: #{tpu_custom_call.1} parent=0
    #allocation2 [shape = 'u8[8192]{0}', space=vmem, size = 0x2000, scoped, tag = 'input window, operand 0, single buffered']
    #allocation3 [shape = 's32[1]{0}', space=sflag, size = 0x4, scoped, tag = 'scoped memory for tpu_custom_call.1']
    #allocation4 [shape = 's32[1]{0}', space=sflag, size = 0x4, scoped, tag = 'scoped memory for tpu_custom_call.1']
    #allocation5 [shape = 'u8[512]{0}', space=vmem, size = 0x400, scoped, tag = 'input window, operand 1, single buffered']
    #allocation6 [shape = 's32[1]{0}', space=sflag, size = 0x4, scoped, tag = 'scoped memory for tpu_custom_call.1']
    #allocation7 [shape = 'u8[16384]{0}', space=vmem, size = 0x4000, scoped, tag = 'input window, operand 3, single buffered']
    #allocation8 [shape = 'u8[8192]{0}', space=vmem, size = 0x2000, scoped, tag = 'output window, operand 0, single buffered']
    #allocation9 [shape = 'u8[8192]{0}', space=vmem, size = 0x2000, scoped, tag = 'output window, operand 1, single buffered']
    #allocation10 [shape = 's32[1]{0}', space=sflag, size = 0x4, scoped, tag = 'scoped memory for tpu_custom_call.1']
    #allocation11 [shape = 'u8[8192]{0}', space=vmem, size = 0x2000, scoped, tag = 'output window, operand 2, single buffered']
    %12 = vsyncpa [#allocation3], 0
    %13 = vsyncpa [#allocation6], 0
    %14 = vsyncpa [#allocation4], 0
    %15 = vsyncpa [#allocation10], 0
    // Predicated region
    $region2: #{tpu_custom_call.1} parent=1 // pred_check
      _
    $region3: #{tpu_custom_call.1} parent=1 // pred_check_branch
      %17 = sbr.rel (0) target = $region5
    $region4: #{tpu_custom_call.1} parent=1 // pred_region
      %19 = vsyncadd [#allocation3], 0
      %s20 = sshll.u32 %s0, 4
      %s21 = int_to_ptr.hbm [resolvable:$true] %s20
      %s22 = sshll.u32 [#allocation2], 4
      %s23 = int_to_ptr.vmem [resolvable:$true] %s22
      %28 = dma.hbm_to_vmem [thread:$0]  %s21, 256, %s23, [#allocation3], 128, 128, 8
    $region5: #{tpu_custom_call.1} parent=1 // pred_fallthru
      _
    // Predicated region
    $region6: #{tpu_custom_call.1} parent=1 // pred_check
      _
    $region7: #{tpu_custom_call.1} parent=1 // pred_check_branch
      %30 = sbr.rel (0) target = $region9
    $region8: #{tpu_custom_call.1} parent=1 // pred_region
      %32 = vsyncadd [#allocation6], 0
      %s34 = sshll.u32 %s1, 4
      %s35 = int_to_ptr.hbm [resolvable:$true] %s34
      %s36 = sshll.u32 [#allocation5], 4
      %s37 = int_to_ptr.vmem [resolvable:$true] %s36
      %39 = dma.hbm_to_vmem [thread:$0]  %s35, 16, %s37, [#allocation6]
    $region9: #{tpu_custom_call.1} parent=1 // pred_fallthru
      _
    // Predicated region
    $region10: #{tpu_custom_call.1} parent=1 // pred_check
      _
    $region11: #{tpu_custom_call.1} parent=1 // pred_check_branch
      %41 = sbr.rel (0) target = $region13
    $region12: #{tpu_custom_call.1} parent=1 // pred_region
      _
    $region13: #{tpu_custom_call.1} parent=1 // pred_fallthru
      _
    // Predicated region
    $region14: #{tpu_custom_call.1} parent=1 // pred_check
      _
    $region15: #{tpu_custom_call.1} parent=1 // pred_check_branch
      %43 = sbr.rel (0) target = $region17
    $region16: #{tpu_custom_call.1} parent=1 // pred_region
      %45 = vsyncadd [#allocation6], 0
      %s46 = sshll.u32 %s3, 4
      %s47 = int_to_ptr.hbm [resolvable:$true] %s46
      %s48 = sshll.u32 [#allocation7], 4
      %s49 = int_to_ptr.vmem [resolvable:$true] %s48
      %54 = dma.hbm_to_vmem [thread:$0]  %s47, 512, %s49, [#allocation6], 128, 128, 8
    $region17: #{tpu_custom_call.1} parent=1 // pred_fallthru
      _
    // Predicated region
    $region18: #{tpu_custom_call.1} parent=1 // pred_check
      _
    $region19: #{tpu_custom_call.1} parent=1 // pred_check_branch
      %56 = sbr.rel (0) target = $region21
    $region20: #{tpu_custom_call.1} parent=1 // pred_region
      %58 = dma.done [#allocation3], 256
    $region21: #{tpu_custom_call.1} parent=1 // pred_fallthru
      _
    // Predicated region
    $region22: #{tpu_custom_call.1} parent=1 // pred_check
      _
    $region23: #{tpu_custom_call.1} parent=1 // pred_check_branch
      %60 = sbr.rel (0) target = $region25
    $region24: #{tpu_custom_call.1} parent=1 // pred_region
      %62 = dma.done [#allocation6], 16
    $region25: #{tpu_custom_call.1} parent=1 // pred_fallthru
      _
    // Predicated region
    $region26: #{tpu_custom_call.1} parent=1 // pred_check
      _
    $region27: #{tpu_custom_call.1} parent=1 // pred_check_branch
      %64 = sbr.rel (0) target = $region29
    $region28: #{tpu_custom_call.1} parent=1 // pred_region
      %66 = dma.done [#allocation6], 512
    $region29: #{tpu_custom_call.1} parent=1 // pred_fallthru
      _
    %v67 = vld [vmem:[#allocation2] sm:$0xff]
    %v68 = vld [vmem:[#allocation2 + $0x8] sm:$0xff]
    %vm69 = vcmask 261120
    %v70 = vsel %vm69, %v67, 0.0
    %71 = vadd.xlane.f32.xlu0 %v70
    %v72 = vpop.xlane.xlu0 %71
    %v73 = vsel %vm69, %v68, 0.0
    %74 = vadd.xlane.f32.xlu0 %v73
    %v75 = vpop.xlane.xlu0 %74
    %v76 = vrcp.pop 32.0
    %v77 = vmul.f32 32.0, %v76
    %v78 = vsub.f32 1.0, %v77
    %v79 = vmul.f32 %v76, %v78
    %v80 = vadd.f32 %v76, %v79
    %vm81 = vweird.f32 %v76
    %v82 = vsel %vm81, %v76, %v80
    %v83 = vmul.f32 %v72, %v82
    %v84 = vmul.f32 %v75, %v82
    %v85 = vsub.f32 %v67, %v83
    %v86 = vsub.f32 %v68, %v84
    %v87 = vmul.f32 %v85, %v85
    %v88 = vmul.f32 %v86, %v86
    %v89 = vsel %vm69, %v87, 0.0
    %90 = vadd.xlane.f32.xlu0 %v89
    %v91 = vpop.xlane.xlu0 %90
    %v92 = vsel %vm69, %v88, 0.0
    %93 = vadd.xlane.f32.xlu0 %v92
    %v94 = vpop.xlane.xlu0 %93
    %v95 = vmul.f32 %v91, 0.032258064
    %v96 = vmul.f32 %v94, 0.032258064
    %v97 = vrsqrt.pop %v95
    %v98 = vmul.f32 %v97, %v95
    %v99 = vmul.f32 %v98, %v97
    %v100 = vmul.f32 0.5, %v99
    %v101 = vsub.f32 1.5, %v100
    %v102 = vmul.f32 %v97, %v101
    %v103 = vmul.f32 %v95, %v102
    %vm104 = vcmp.eq.f32.partialorder %v95, inf
    %v105 = vsel %vm104, %v95, %v103
    %vm106 = vcmp.eq.f32.partialorder %v95, 0.0
    %v107 = vand.u32 %v95, 2147483648
    %v108 = vsel %vm106, %v107, %v105
    %v109 = vrsqrt.pop %v96
    %v110 = vmul.f32 %v109, %v96
    %v111 = vmul.f32 %v110, %v109
    %v112 = vmul.f32 0.5, %v111
    %v113 = vsub.f32 1.5, %v112
    %v114 = vmul.f32 %v109, %v113
    %v115 = vmul.f32 %v96, %v114
    %vm116 = vcmp.eq.f32.partialorder %v96, inf
    %v117 = vsel %vm116, %v96, %v115
    %vm118 = vcmp.eq.f32.partialorder %v96, 0.0
    %v119 = vand.u32 %v96, 2147483648
    %v120 = vsel %vm118, %v119, %v117
    %v121 = vld [vmem:[#allocation5] sm:$0x1]
    %v123 = vperm.slane %v121, 0
    %v125 = vmul.f32 %v123, %v85
    %v126 = vmul.f32 %v123, %v86
    %v127 = vadd.f32 %v108, 1e-06
    %v128 = vadd.f32 %v120, 1e-06
    %v129 = vrcp.pop %v127
    %v130 = vmul.f32 %v127, %v129
    %v131 = vsub.f32 1.0, %v130
    %v132 = vmul.f32 %v129, %v131
    %v133 = vadd.f32 %v129, %v132
    %vm134 = vweird.f32 %v127
    %vm135 = vweird.f32 %v129
    %vm136 = vmor %vm134, %vm135
    %v137 = vsel %vm136, %v129, %v133
    %v138 = vand.u32 2147483647, %v127
    %vm139 = vcmp.eq.f32.partialorder %v138, 8.507059e+37
    %v140 = vand.u32 %v127, 2147483648
    %v141 = vor.u32 1.1754944e-38, %v140
    %v142 = vsel %vm139, %v141, %v137
    %v143 = vmul.f32 %v125, %v142
    %v144 = vrcp.pop %v128
    %v145 = vmul.f32 %v128, %v144
    %v146 = vsub.f32 1.0, %v145
    %v147 = vmul.f32 %v144, %v146
    %v148 = vadd.f32 %v144, %v147
    %vm149 = vweird.f32 %v128
    %vm150 = vweird.f32 %v144
    %vm151 = vmor %vm149, %vm150
    %v152 = vsel %vm151, %v144, %v148
    %v153 = vand.u32 2147483647, %v128
    %vm154 = vcmp.eq.f32.partialorder %v153, 8.507059e+37
    %v155 = vand.u32 %v128, 2147483648
    %v156 = vor.u32 1.1754944e-38, %v155
    %v157 = vsel %vm154, %v156, %v152
    %v158 = vmul.f32 %v126, %v157
    %v159 = vld [vmem:[%s2] sm:$0x1]
    %v161 = vperm.slane %v159, 0
    %v163 = vadd.f32 %v143, %v161
    %v164 = vadd.f32 %v158, %v161
    %v165 = vld [vmem:[#allocation7] sm:$0xff]
    %v166 = vld [vmem:[#allocation7 + $0x8] sm:$0xff]
    %v167 = vld [vmem:[#allocation7 + $0x10] sm:$0xff]
    %v168 = vld [vmem:[#allocation7 + $0x18] sm:$0xff]
    %v170 = vsel %vm69, %v163, 0
    %v173 = vsel %vm69, %v164, 0
    %175 = vmatpush.msra.mxu0 0.0
    %176 = vmatpush.msra.mxu0 0.0
    %177 = vmatpush.msra.mxu0 0.0
    %178 = vmatpush.msra.mxu0 0.0
    %179 = vmatpush.msra.mxu0 0.0
    %180 = vmatpush.msra.mxu0 0.0
    %181 = vmatpush.msra.mxu0 0.0
    %182 = vmatpush.msra.mxu0 0.0
    %183 = vmatpush.msra.mxu0 0.0
    %184 = vmatpush.msra.mxu0 0.0
    %185 = vmatpush.msra.mxu0 0.0
    %186 = vmatpush.msra.mxu0 0.0
    %187 = vmatpush.msra.mxu0 %v168
    %188 = vmatpush.msra.mxu0 %v167
    %189 = vmatpush.msra.mxu0 %v166
    %190 = vmatpush.msra.mxu0 %v165
    %191 = vmatmul.f32.gmra.mxu0 %v170
    %v192 = vpop.f32.mrf.mxu0
    %v193 = vadd.f32 0.0, %v192
    %194 = vmatmul.f32.gmra.mxu0 %v173
    %v195 = vpop.f32.mrf.mxu0
    %v196 = vadd.f32 0.0, %v195
    %197 = vdwg.mxu0
    %198 = vst.msk [vmem:[#allocation8] sm:$0xff] %vm69, %v193
    %199 = vst.msk [vmem:[#allocation8 + $0x8] sm:$0xff] %vm69, %v196
    %202 = vrot.lane.b32.xlu0 %v193, 96
    %v203 = vpop.permute.xlu0 %202
    %204 = vrot.lane.b32.xlu0 %v196, 96
    %v205 = vpop.permute.xlu0 %204
    %208 = vst.msk [vmem:[#allocation9] sm:$0xff] %vm69, %v203
    %209 = vst.msk [vmem:[#allocation9 + $0x8] sm:$0xff] %vm69, %v205
    %210 = vrot.lane.b32.xlu0 %v193, 64
    %v211 = vpop.permute.xlu0 %210
    %212 = vrot.lane.b32.xlu0 %v196, 64
    %v213 = vpop.permute.xlu0 %212
    %216 = vst.msk [vmem:[#allocation11] sm:$0xff] %vm69, %v211
    %217 = vst.msk [vmem:[#allocation11 + $0x8] sm:$0xff] %vm69, %v213
    // Predicated region
    $region30: #{tpu_custom_call.1} parent=1 // pred_check
      _
    $region31: #{tpu_custom_call.1} parent=1 // pred_check_branch
      %219 = sbr.rel (0) target = $region33
    $region32: #{tpu_custom_call.1} parent=1 // pred_region
      %221 = vsyncadd [#allocation4], 0
      %s222 = sshll.u32 [#allocation8], 4
      %s223 = int_to_ptr.vmem [resolvable:$true] %s222
      %s224 = sshll.u32 %s4, 4
      %s225 = int_to_ptr.hbm [resolvable:$true] %s224
      %230 = dma.vmem_to_hbm [thread:$0]  %s223, 256, %s225, [#allocation4], 128, 128, 8
    $region33: #{tpu_custom_call.1} parent=1 // pred_fallthru
      _
    // Predicated region
    $region34: #{tpu_custom_call.1} parent=1 // pred_check
      _
    $region35: #{tpu_custom_call.1} parent=1 // pred_check_branch
      %232 = sbr.rel (0) target = $region37
    $region36: #{tpu_custom_call.1} parent=1 // pred_region
      %234 = vsyncadd [#allocation10], 0
      %s235 = sshll.u32 [#allocation9], 4
      %s236 = int_to_ptr.vmem [resolvable:$true] %s235
      %s237 = sshll.u32 %s5, 4
      %s238 = int_to_ptr.hbm [resolvable:$true] %s237
      %243 = dma.vmem_to_hbm [thread:$0]  %s236, 256, %s238, [#allocation10], 128, 128, 8
    $region37: #{tpu_custom_call.1} parent=1 // pred_fallthru
      _
    // Predicated region
    $region38: #{tpu_custom_call.1} parent=1 // pred_check
      _
    $region39: #{tpu_custom_call.1} parent=1 // pred_check_branch
      %245 = sbr.rel (0) target = $region41
    $region40: #{tpu_custom_call.1} parent=1 // pred_region
      %247 = vsyncadd [#allocation10], 0
      %s248 = sshll.u32 [#allocation11], 4
      %s249 = int_to_ptr.vmem [resolvable:$true] %s248
      %s250 = sshll.u32 %s6, 4
      %s251 = int_to_ptr.hbm [resolvable:$true] %s250
      %256 = dma.vmem_to_hbm [thread:$0]  %s249, 256, %s251, [#allocation10], 128, 128, 8
    $region41: #{tpu_custom_call.1} parent=1 // pred_fallthru
      _
    // Predicated region
    $region42: #{tpu_custom_call.1} parent=1 // pred_check
      _
    $region43: #{tpu_custom_call.1} parent=1 // pred_check_branch
      %258 = sbr.rel (0) target = $region45
    $region44: #{tpu_custom_call.1} parent=1 // pred_region
      %260 = dma.done [#allocation4], 256
    $region45: #{tpu_custom_call.1} parent=1 // pred_fallthru
      _
    // Predicated region
    $region46: #{tpu_custom_call.1} parent=1 // pred_check
      _
    $region47: #{tpu_custom_call.1} parent=1 // pred_check_branch
      %262 = sbr.rel (0) target = $region49
    $region48: #{tpu_custom_call.1} parent=1 // pred_region
      %264 = dma.done [#allocation10], 256
    $region49: #{tpu_custom_call.1} parent=1 // pred_fallthru
      _
    // Predicated region
    $region50: #{tpu_custom_call.1} parent=1 // pred_check
      _
    $region51: #{tpu_custom_call.1} parent=1 // pred_check_branch
      %266 = sbr.rel (0) target = $region53
    $region52: #{tpu_custom_call.1} parent=1 // pred_region
      %268 = dma.done [#allocation10], 256
    $region53: #{tpu_custom_call.1} parent=1 // pred_fallthru
      _
    %269 = vsyncpa [#allocation3], 1
    %270 = vsyncpa [#allocation6], 1
    %271 = vsyncpa [#allocation4], 1
    %272 = vsyncpa [#allocation10], 1

</llo_original>
